<compile_context>
chip_gen: v5e
topology: v5e:2x2
jax: 0.10.0
libtpu: 0.0.40
codegen_flags: <defaults>
</compile_context>

<pallas_src>
import jax
import jax.numpy as jnp
from jax.experimental import pallas as pl
from jax.experimental.pallas import tpu as pltpu

# Real (PyTorch) dimensions
D_IN, D_H1, D_H2, D_OUT = 2, 4, 8, 1

PAD = 8                       # hidden feature dims padded to 8 (sublane axis)
TB_MAX = 131072               # max batch lanes per grid step (multiple of CHUNK)
CHUNK = 1024                  # in-kernel compute chunk (lanes), multiple of 128
VMEM_LIMIT_BYTES = 48 * 1024 * 1024   # explicit scoped-VMEM budget (v7x-safe)


def _mlp_kernel(x_ref, w_ref, b_ref, o_ref):
    """x_ref: (2, tb) transposed inputs (features on sublanes, batch on lanes);
    w_ref: (3, 8, 8) stacked [out, in] weights; b_ref: (3, 8, 1) biases;
    o_ref: (1, tb) lane-dense outputs."""
    # Tiny, grid-invariant params: load once, hoisted out of the chunk loop.
    w1 = w_ref[0, :, :D_IN]       # (8, 2)  only the real input columns
    w2 = w_ref[1]                 # (8, 8)
    w3 = w_ref[2, :D_OUT, :]      # (1, 8)  only the real output row
    b1 = b_ref[0]                 # (8, 1)
    b2 = b_ref[1]                 # (8, 1)
    b3 = b_ref[2, :D_OUT, :]      # (1, 1)

    tb = x_ref.shape[1]           # static
    n_chunks = tb // CHUNK        # tb is always a multiple of CHUNK

    def body(c, carry):
        s = pl.multiple_of(c * CHUNK, CHUNK)
        xc = x_ref[:, pl.ds(s, CHUNK)]                                   # (2, C)
        # layer1 + ReLU  (K=2 contraction; compute is noise, HBM is the limit)
        h1 = jnp.dot(w1, xc, preferred_element_type=jnp.float32) + b1    # (8, C)
        h1 = jnp.maximum(h1, 0.0)
        # layer2 + ReLU
        h2 = jnp.dot(w2, h1, preferred_element_type=jnp.float32) + b2    # (8, C)
        h2 = jnp.maximum(h2, 0.0)
        # layer3: single real output row only
        y = jnp.dot(w3, h2, preferred_element_type=jnp.float32) + b3     # (1, C)
        o_ref[:, pl.ds(s, CHUNK)] = y.astype(o_ref.dtype)
        return carry

    jax.lax.fori_loop(0, n_chunks, body, 0, unroll=False)


def prepare_params(params):
    """One-time packing: transpose each weight to [out, in], zero-pad to (8, 8),
    stack into (3, 8, 8); biases -> (3, 8, 1).  Do NOT call per forward."""
    w1, b1, w2, b2, w3, b3 = params

    def padw(w):                       # w is stored [in, out]
        wt = w.T.astype(jnp.float32)   # [out, in]
        return jnp.zeros((PAD, PAD), jnp.float32).at[: wt.shape[0], : wt.shape[1]].set(wt)

    def padb(b):
        return jnp.zeros((PAD, 1), jnp.float32).at[: b.shape[0], 0].set(b.astype(jnp.float32))

    w_stack = jnp.stack([padw(w1), padw(w2), padw(w3)])   # (3, 8, 8)
    b_stack = jnp.stack([padb(b1), padb(b2), padb(b3)])   # (3, 8, 1)
    return w_stack, b_stack


@jax.jit
def net_forward(x, w_stack, b_stack):
    """x: [batch, 2] float32.  Returns y: [batch, 1] float32."""
    batch = x.shape[0]

    # Grid first (so tail waste is capped at < CHUNK lanes per step), then the
    # per-step lane tile, rounded up to a CHUNK multiple.
    grid_n = max(1, pl.cdiv(batch, TB_MAX))
    if batch >= 65536:
        # Give v7x's two TensorCores work even when one TB_MAX tile would do;
        # the extra grid step is negligible at this size (no-op on v5e/v6e).
        grid_n = max(grid_n, 2)
    tb = pl.cdiv(pl.cdiv(batch, grid_n), CHUNK) * CHUNK
    bpad = grid_n * tb
    grid = (grid_n,)

    # Single cheap pre-pass: transposed, feature-dense input (2, bpad).
    # Padded batch lanes are zero; their (garbage) outputs are sliced off.
    xT = jnp.zeros((D_IN, bpad), jnp.float32).at[:, :batch].set(x.T)

    yT = pl.pallas_call(
        _mlp_kernel,
        out_shape=jax.ShapeDtypeStruct((1, bpad), jnp.float32),
        grid=grid,
        in_specs=[
            pl.BlockSpec((D_IN, tb), lambda i: (0, i)),        # x tile (streams)
            pl.BlockSpec((3, PAD, PAD), lambda i: (0, 0, 0)),  # weights (resident)
            pl.BlockSpec((3, PAD, 1), lambda i: (0, 0, 0)),    # biases (resident)
        ],
        out_specs=pl.BlockSpec((1, tb), lambda i: (0, i)),     # lane-dense output
        compiler_params=pltpu.CompilerParams(
            dimension_semantics=("parallel",),
            vmem_limit_bytes=VMEM_LIMIT_BYTES,
        ),
    )(xT, w_stack, b_stack)

    return yT[0, :batch].reshape(batch, D_OUT)


def init_params(key):
    """Deterministic init matching nn.Linear shapes (weights stored as [in, out])."""
    ks = jax.random.split(key, 6)

    def lin(kw, kb, fan_in, fan_out):
        bound = 1.0 / jnp.sqrt(fan_in)
        w = jax.random.uniform(kw, (fan_in, fan_out), jnp.float32, -bound, bound)
        b = jax.random.uniform(kb, (fan_out,), jnp.float32, -bound, bound)
        return w, b

    w1, b1 = lin(ks[0], ks[1], D_IN, D_H1)
    w2, b2 = lin(ks[2], ks[3], D_H1, D_H2)
    w3, b3 = lin(ks[4], ks[5], D_H2, D_OUT)
    return (w1, b1, w2, b2, w3, b3)


def _reference(x, params):
    w1, b1, w2, b2, w3, b3 = params
    h1 = jnp.maximum(x @ w1 + b1, 0.0)
    h2 = jnp.maximum(h1 @ w2 + b2, 0.0)
    return h2 @ w3 + b3


if __name__ == "__main__":
    key = jax.random.PRNGKey(0)
    kx, kp = jax.random.split(key)
    batch = 8
    x = jax.random.normal(kx, (batch, D_IN), jnp.float32)
    params = init_params(kp)
    w_stack, b_stack = prepare_params(params)   # one-time packing (cached)

    y = net_forward(x, w_stack, b_stack)
    y = jax.block_until_ready(y)

    y_ref = _reference(x, params)
    assert y.shape == (batch, D_OUT)
    assert jnp.allclose(y, y_ref, atol=1e-5, rtol=1e-5)
    print("KERNEL_OK")
</pallas_src>

<mosaic_0001>
module attributes {stable_mosaic.version = 11 : i64} {
  func.func @_mlp_kernel(%arg0: i32, %arg1: memref<2x1024xf32, #tpu.memory_space<vmem>>, %arg2: memref<3x8x8xf32, #tpu.memory_space<vmem>>, %arg3: memref<3x8x1xf32, #tpu.memory_space<vmem>>, %arg4: memref<1x1024xf32, #tpu.memory_space<vmem>>) attributes {dimension_semantics = [#tpu.dimension_semantics<parallel>], iteration_bounds = array<i64: 1>, scalar_prefetch = 0 : i64, scratch_operands = 0 : i64, tpu.core_type = #tpu.core_type<tc>, window_params = [{transform_indices = @transform_0, window_bounds = array<i64: 2, 1024>}, {pipeline_mode = #tpu.pipeline_mode<synchronous>, transform_indices = @transform_1, window_bounds = array<i64: 3, 8, 8>}, {pipeline_mode = #tpu.pipeline_mode<synchronous>, transform_indices = @transform_2, window_bounds = array<i64: 3, 8, 1>}, {transform_indices = @transform_3, window_bounds = array<i64: 1, 1024>}]} {
    %c0 = arith.constant 0 : index
    %c0_0 = arith.constant 0 : index
    %c0_1 = arith.constant 0 : index
    %0 = vector.load %arg2[%c0, %c0_0, %c0_1] : memref<3x8x8xf32, #tpu.memory_space<vmem>>, vector<1x8x2xf32>
    %1 = vector.shape_cast %0 : vector<1x8x2xf32> to vector<8x2xf32>
    %c1 = arith.constant 1 : index
    %c0_2 = arith.constant 0 : index
    %c0_3 = arith.constant 0 : index
    %2 = vector.load %arg2[%c1, %c0_2, %c0_3] : memref<3x8x8xf32, #tpu.memory_space<vmem>>, vector<1x8x8xf32>
    %3 = vector.shape_cast %2 : vector<1x8x8xf32> to vector<8x8xf32>
    %c2 = arith.constant 2 : index
    %c0_4 = arith.constant 0 : index
    %c0_5 = arith.constant 0 : index
    %4 = vector.load %arg2[%c2, %c0_4, %c0_5] : memref<3x8x8xf32, #tpu.memory_space<vmem>>, vector<1x1x8xf32>
    %5 = vector.shape_cast %4 : vector<1x1x8xf32> to vector<1x8xf32>
    %c0_6 = arith.constant 0 : index
    %c0_7 = arith.constant 0 : index
    %c0_8 = arith.constant 0 : index
    %6 = vector.load %arg3[%c0_6, %c0_7, %c0_8] : memref<3x8x1xf32, #tpu.memory_space<vmem>>, vector<1x8x1xf32>
    %7 = vector.shape_cast %6 : vector<1x8x1xf32> to vector<8x1xf32>
    %c1_9 = arith.constant 1 : index
    %c0_10 = arith.constant 0 : index
    %c0_11 = arith.constant 0 : index
    %8 = vector.load %arg3[%c1_9, %c0_10, %c0_11] : memref<3x8x1xf32, #tpu.memory_space<vmem>>, vector<1x8x1xf32>
    %9 = vector.shape_cast %8 : vector<1x8x1xf32> to vector<8x1xf32>
    %c2_12 = arith.constant 2 : index
    %c0_13 = arith.constant 0 : index
    %c0_14 = arith.constant 0 : index
    %10 = vector.load %arg3[%c2_12, %c0_13, %c0_14] : memref<3x8x1xf32, #tpu.memory_space<vmem>>, vector<1x1x1xf32>
    %11 = vector.shape_cast %10 : vector<1x1x1xf32> to vector<1x1xf32>
    %c0_i32 = arith.constant 0 : i32
    %c1024_i32 = arith.constant 1024 : i32
    %12 = arith.muli %c0_i32, %c1024_i32 : i32
    %13 = tpu.assume_multiple %12, 1024 : i32
    %c0_15 = arith.constant 0 : index
    %14 = arith.index_cast %13 : i32 to index
    %15 = vector.load %arg1[%c0_15, %14] : memref<2x1024xf32, #tpu.memory_space<vmem>>, vector<2x1024xf32>
    %cst = arith.constant dense<0.000000e+00> : vector<8x1024xf32>
    %16 = tpu.matmul %1, %15, %cst {dimension_numbers = #tpu.dot_dimension_numbers<[1], [0], [0], [1], [0, 0, 1, 1], [], []>} : vector<8x2xf32>, vector<2x1024xf32>, vector<8x1024xf32> -> vector<8x1024xf32>
    %17 = vector.broadcast %7 : vector<8x1xf32> to vector<8x1024xf32>
    %18 = arith.addf %16, %17 : vector<8x1024xf32>
    %cst_16 = arith.constant 0.000000e+00 : f32
    %19 = vector.broadcast %cst_16 : f32 to vector<8x1024xf32>
    %20 = arith.maximumf %18, %19 : vector<8x1024xf32>
    %cst_17 = arith.constant dense<0.000000e+00> : vector<8x1024xf32>
    %21 = tpu.matmul %3, %20, %cst_17 {dimension_numbers = #tpu.dot_dimension_numbers<[1], [0], [0], [1], [0, 0, 1, 1], [], []>} : vector<8x8xf32>, vector<8x1024xf32>, vector<8x1024xf32> -> vector<8x1024xf32>
    %22 = vector.broadcast %9 : vector<8x1xf32> to vector<8x1024xf32>
    %23 = arith.addf %21, %22 : vector<8x1024xf32>
    %cst_18 = arith.constant 0.000000e+00 : f32
    %24 = vector.broadcast %cst_18 : f32 to vector<8x1024xf32>
    %25 = arith.maximumf %23, %24 : vector<8x1024xf32>
    %cst_19 = arith.constant dense<0.000000e+00> : vector<1x1024xf32>
    %26 = tpu.matmul %5, %25, %cst_19 {dimension_numbers = #tpu.dot_dimension_numbers<[1], [0], [0], [1], [0, 0, 1, 1], [], []>} : vector<1x8xf32>, vector<8x1024xf32>, vector<1x1024xf32> -> vector<1x1024xf32>
    %27 = vector.broadcast %11 : vector<1x1xf32> to vector<1x1024xf32>
    %28 = arith.addf %26, %27 : vector<1x1024xf32>
    %c0_20 = arith.constant 0 : index
    %29 = arith.index_cast %13 : i32 to index
    %30 = vector.load %arg4[%c0_20, %29] : memref<1x1024xf32, #tpu.memory_space<vmem>>, vector<1x1024xf32>
    tpu.vector_store %arg4[%c0_20, %29], %28 {strides = array<i32>} : memref<1x1024xf32, #tpu.memory_space<vmem>>, vector<1x1024xf32>,
    %c1_i32 = arith.constant 1 : i32
    return
  }
  func.func @transform_0(%arg0: i32) -> (i32, i32) {
    %c0_i32 = arith.constant 0 : i32
    %c0_i32_0 = arith.constant 0 : i32
    return %c0_i32, %arg0 : i32, i32
  }
  func.func @transform_1(%arg0: i32) -> (i32, i32, i32) {
    %c0_i32 = arith.constant 0 : i32
    %c0_i32_0 = arith.constant 0 : i32
    %c0_i32_1 = arith.constant 0 : i32
    %c0_i32_2 = arith.constant 0 : i32
    return %c0_i32, %c0_i32_0, %c0_i32_1 : i32, i32, i32
  }
  func.func @transform_2(%arg0: i32) -> (i32, i32, i32) {
    %c0_i32 = arith.constant 0 : i32
    %c0_i32_0 = arith.constant 0 : i32
    %c0_i32_1 = arith.constant 0 : i32
    %c0_i32_2 = arith.constant 0 : i32
    return %c0_i32, %c0_i32_0, %c0_i32_1 : i32, i32, i32
  }
  func.func @transform_3(%arg0: i32) -> (i32, i32) {
    %c0_i32 = arith.constant 0 : i32
    %c0_i32_0 = arith.constant 0 : i32
    return %c0_i32, %arg0 : i32, i32
  }
}

</mosaic_0001>

<llo_original>
// kernel: net_forward.1
$region0: #{net_forward.1}
  #allocation0 [shape = 'u32[]', space=smem, size = 0x4, offset = 0x4, fixed_abs, tag = 'smem constant byte address 0x4 - core index']
  #allocation1 [shape = 'u32[72,128]{1,0:T(1,128)}', space=vmem, size = 0x9000, scoped, tag = 'internal scratch']
  %s0 = inlined_call_operand.vmem [shape: f32[2,1024], index: 0, kind: input, shape index: {}]
  %s1 = inlined_call_operand.vmem [shape: f32[3,8,8], index: 1, kind: input, shape index: {}]
  %s2 = inlined_call_operand.vmem [shape: f32[3,8,1], index: 2, kind: input, shape index: {}]
  %s3 = inlined_call_operand.vmem [shape: f32[1,1024], index: 3, kind: output, shape index: {}]
  %s4 = sld [smem:[#allocation0]]
  $region22: #{net_forward.1} parent=0
    _
  %s6 = ssub.s32 1, %s4
  %s7 = scalar_select 0, %s6, %s4
  // Predicated region
  $region2: #{net_forward.1} parent=0 // pred_check
    _
  $region3: #{net_forward.1} parent=0 // pred_check_branch
    %9 = sbr.rel (0) target = $region5
  $region4: #{net_forward.1} parent=0 // pred_region
    _
  $region5: #{net_forward.1} parent=0 // pred_fallthru
    _
  // Predicated region
  $region6: #{net_forward.1} parent=0 // pred_check
    _
  $region7: #{net_forward.1} parent=0 // pred_check_branch
    %11 = sbr.rel (0) target = $region9
  $region8: #{net_forward.1} parent=0 // pred_region
    _
  $region9: #{net_forward.1} parent=0 // pred_fallthru
    _
  // Predicated region
  $region10: #{net_forward.1} parent=0 // pred_check
    _
  $region11: #{net_forward.1} parent=0 // pred_check_branch
    %13 = sbr.rel (0) target = $region13
  $region12: #{net_forward.1} parent=0 // pred_region
    _
  $region13: #{net_forward.1} parent=0 // pred_fallthru
    _
  %v14 = vld [vmem:[%s1] sm:$0xff]
  %s15 = scalar_lea.vmem %s1, 8
  %v16 = vld [vmem:[%s15] sm:$0xff]
  %s17 = scalar_lea.vmem %s1, 16
  %v18 = vld [vmem:[%s17] sm:$0x1]
  %v19 = vld [vmem:[%s2] sm:$0xff]
  %s20 = scalar_lea.vmem %s2, 8
  %v21 = vld [vmem:[%s20] sm:$0xff]
  %s22 = scalar_lea.vmem %s2, 16
  %v23 = vld [vmem:[%s22] sm:$0x1]
  %v24 = vld [vmem:[%s0] sm:$0xff]
  %v25 = vld [vmem:[%s0 + $0x8] sm:$0xff]
  %27 = vset.pattern.permute.xlu0 0
  %28 = vperm.xlu0 %27, %v19
  %v29 = vpop.permute.xlu0 %28
  %33 = vst [vmem:[#allocation1] ss:$4 sm:$0xff] %v24
  %s34 = scalar_lea.vmem [#allocation1], 32
  %35 = vst [vmem:[%s34] ss:$4 sm:$0xff] %v25
  %v36 = vld.sshfl [vmem:[#allocation1] sm:$0xff pattern:$0x73625140]
  %v37 = vld.sshfl [vmem:[#allocation1 + $0x8] sm:$0xff pattern:$0x73625140]
  %v38 = vld.sshfl [vmem:[#allocation1 + $0x10] sm:$0xff pattern:$0x73625140]
  %v39 = vld.sshfl [vmem:[#allocation1 + $0x18] sm:$0xff pattern:$0x73625140]
  %v40 = vld.sshfl [vmem:[#allocation1 + $0x20] sm:$0xff pattern:$0x73625140]
  %v41 = vld.sshfl [vmem:[#allocation1 + $0x28] sm:$0xff pattern:$0x73625140]
  %v42 = vld.sshfl [vmem:[#allocation1 + $0x30] sm:$0xff pattern:$0x73625140]
  %v43 = vld.sshfl [vmem:[#allocation1 + $0x38] sm:$0xff pattern:$0x73625140]
  %vm44 = vcmask 15360
  %v46 = vsel %vm44, %v14, 0
  %vm48 = vcmask 1041408
  %v49 = vsel %vm48, %v36, 0
  %v51 = vsel %vm48, %v37, 0
  %v53 = vsel %vm48, %v38, 0
  %v55 = vsel %vm48, %v39, 0
  %v57 = vsel %vm48, %v40, 0
  %v59 = vsel %vm48, %v41, 0
  %v61 = vsel %vm48, %v42, 0
  %v63 = vsel %vm48, %v43, 0
  %65 = vmatpush.msra.mxu0 0.0
  %66 = vmatpush.msra.mxu0 0.0
  %67 = vmatpush.msra.mxu0 0.0
  %68 = vmatpush.msra.mxu0 0.0
  %69 = vmatpush.msra.mxu0 0.0
  %70 = vmatpush.msra.mxu0 0.0
  %71 = vmatpush.msra.mxu0 0.0
  %72 = vmatpush.msra.mxu0 0.0
  %73 = vmatpush.msra.mxu0 0.0
  %74 = vmatpush.msra.mxu0 0.0
  %75 = vmatpush.msra.mxu0 0.0
  %76 = vmatpush.msra.mxu0 0.0
  %77 = vmatpush.msra.mxu0 0.0
  %78 = vmatpush.msra.mxu0 0.0
  %79 = vmatpush.msra.mxu0 0.0
  %80 = vmatpush.msra.mxu0 %v49
  %81 = vmatmul.f32.gmra.mxu0 %v46
  %v82 = vpop.f32.mrf.mxu0
  %v83 = vadd.f32 %v29, %v82
  %84 = vdwg.mxu0
  %85 = vmatpush.msra.mxu0 0.0
  %86 = vmatpush.msra.mxu0 0.0
  %87 = vmatpush.msra.mxu0 0.0
  %88 = vmatpush.msra.mxu0 0.0
  %89 = vmatpush.msra.mxu0 0.0
  %90 = vmatpush.msra.mxu0 0.0
  %91 = vmatpush.msra.mxu0 0.0
  %92 = vmatpush.msra.mxu0 0.0
  %93 = vmatpush.msra.mxu0 0.0
  %94 = vmatpush.msra.mxu0 0.0
  %95 = vmatpush.msra.mxu0 0.0
  %96 = vmatpush.msra.mxu0 0.0
  %97 = vmatpush.msra.mxu0 0.0
  %98 = vmatpush.msra.mxu0 0.0
  %99 = vmatpush.msra.mxu0 0.0
  %100 = vmatpush.msra.mxu0 %v51
  %101 = vmatmul.f32.gmra.mxu0 %v46
  %v102 = vpop.f32.mrf.mxu0
  %v103 = vadd.f32 %v29, %v102
  %104 = vdwg.mxu0
  %105 = vmatpush.msra.mxu0 0.0
  %106 = vmatpush.msra.mxu0 0.0
  %107 = vmatpush.msra.mxu0 0.0
  %108 = vmatpush.msra.mxu0 0.0
  %109 = vmatpush.msra.mxu0 0.0
  %110 = vmatpush.msra.mxu0 0.0
  %111 = vmatpush.msra.mxu0 0.0
  %112 = vmatpush.msra.mxu0 0.0
  %113 = vmatpush.msra.mxu0 0.0
  %114 = vmatpush.msra.mxu0 0.0
  %115 = vmatpush.msra.mxu0 0.0
  %116 = vmatpush.msra.mxu0 0.0
  %117 = vmatpush.msra.mxu0 0.0
  %118 = vmatpush.msra.mxu0 0.0
  %119 = vmatpush.msra.mxu0 0.0
  %120 = vmatpush.msra.mxu0 %v53
  %121 = vmatmul.f32.gmra.mxu0 %v46
  %v122 = vpop.f32.mrf.mxu0
  %v123 = vadd.f32 %v29, %v122
  %124 = vdwg.mxu0
  %125 = vmatpush.msra.mxu0 0.0
  %126 = vmatpush.msra.mxu0 0.0
  %127 = vmatpush.msra.mxu0 0.0
  %128 = vmatpush.msra.mxu0 0.0
  %129 = vmatpush.msra.mxu0 0.0
  %130 = vmatpush.msra.mxu0 0.0
  %131 = vmatpush.msra.mxu0 0.0
  %132 = vmatpush.msra.mxu0 0.0
  %133 = vmatpush.msra.mxu0 0.0
  %134 = vmatpush.msra.mxu0 0.0
  %135 = vmatpush.msra.mxu0 0.0
  %136 = vmatpush.msra.mxu0 0.0
  %137 = vmatpush.msra.mxu0 0.0
  %138 = vmatpush.msra.mxu0 0.0
  %139 = vmatpush.msra.mxu0 0.0
  %140 = vmatpush.msra.mxu0 %v55
  %141 = vmatmul.f32.gmra.mxu0 %v46
  %v142 = vpop.f32.mrf.mxu0
  %v143 = vadd.f32 %v29, %v142
  %144 = vdwg.mxu0
  %145 = vmatpush.msra.mxu0 0.0
  %146 = vmatpush.msra.mxu0 0.0
  %147 = vmatpush.msra.mxu0 0.0
  %148 = vmatpush.msra.mxu0 0.0
  %149 = vmatpush.msra.mxu0 0.0
  %150 = vmatpush.msra.mxu0 0.0
  %151 = vmatpush.msra.mxu0 0.0
  %152 = vmatpush.msra.mxu0 0.0
  %153 = vmatpush.msra.mxu0 0.0
  %154 = vmatpush.msra.mxu0 0.0
  %155 = vmatpush.msra.mxu0 0.0
  %156 = vmatpush.msra.mxu0 0.0
  %157 = vmatpush.msra.mxu0 0.0
  %158 = vmatpush.msra.mxu0 0.0
  %159 = vmatpush.msra.mxu0 0.0
  %160 = vmatpush.msra.mxu0 %v57
  %161 = vmatmul.f32.gmra.mxu0 %v46
  %v162 = vpop.f32.mrf.mxu0
  %v163 = vadd.f32 %v29, %v162
  %164 = vdwg.mxu0
  %165 = vmatpush.msra.mxu0 0.0
  %166 = vmatpush.msra.mxu0 0.0
  %167 = vmatpush.msra.mxu0 0.0
  %168 = vmatpush.msra.mxu0 0.0
  %169 = vmatpush.msra.mxu0 0.0
  %170 = vmatpush.msra.mxu0 0.0
  %171 = vmatpush.msra.mxu0 0.0
  %172 = vmatpush.msra.mxu0 0.0
  %173 = vmatpush.msra.mxu0 0.0
  %174 = vmatpush.msra.mxu0 0.0
  %175 = vmatpush.msra.mxu0 0.0
  %176 = vmatpush.msra.mxu0 0.0
  %177 = vmatpush.msra.mxu0 0.0
  %178 = vmatpush.msra.mxu0 0.0
  %179 = vmatpush.msra.mxu0 0.0
  %180 = vmatpush.msra.mxu0 %v59
  %181 = vmatmul.f32.gmra.mxu0 %v46
  %v182 = vpop.f32.mrf.mxu0
  %v183 = vadd.f32 %v29, %v182
  %184 = vdwg.mxu0
  %185 = vmatpush.msra.mxu0 0.0
  %186 = vmatpush.msra.mxu0 0.0
  %187 = vmatpush.msra.mxu0 0.0
  %188 = vmatpush.msra.mxu0 0.0
  %189 = vmatpush.msra.mxu0 0.0
  %190 = vmatpush.msra.mxu0 0.0
  %191 = vmatpush.msra.mxu0 0.0
  %192 = vmatpush.msra.mxu0 0.0
  %193 = vmatpush.msra.mxu0 0.0
  %194 = vmatpush.msra.mxu0 0.0
  %195 = vmatpush.msra.mxu0 0.0
  %196 = vmatpush.msra.mxu0 0.0
  %197 = vmatpush.msra.mxu0 0.0
  %198 = vmatpush.msra.mxu0 0.0
  %199 = vmatpush.msra.mxu0 0.0
  %200 = vmatpush.msra.mxu0 %v61
  %201 = vmatmul.f32.gmra.mxu0 %v46
  %v202 = vpop.f32.mrf.mxu0
  %v203 = vadd.f32 %v29, %v202
  %204 = vdwg.mxu0
  %205 = vmatpush.msra.mxu0 0.0
  %206 = vmatpush.msra.mxu0 0.0
  %207 = vmatpush.msra.mxu0 0.0
  %208 = vmatpush.msra.mxu0 0.0
  %209 = vmatpush.msra.mxu0 0.0
  %210 = vmatpush.msra.mxu0 0.0
  %211 = vmatpush.msra.mxu0 0.0
  %212 = vmatpush.msra.mxu0 0.0
  %213 = vmatpush.msra.mxu0 0.0
  %214 = vmatpush.msra.mxu0 0.0
  %215 = vmatpush.msra.mxu0 0.0
  %216 = vmatpush.msra.mxu0 0.0
  %217 = vmatpush.msra.mxu0 0.0
  %218 = vmatpush.msra.mxu0 0.0
  %219 = vmatpush.msra.mxu0 0.0
  %220 = vmatpush.msra.mxu0 %v63
  %221 = vmatmul.f32.gmra.mxu0 %v46
  %v222 = vpop.f32.mrf.mxu0
  %v223 = vadd.f32 %v29, %v222
  %224 = vdwg.mxu0
  %v225 = vmax.f32 %v83, 0.0
  %v226 = vmax.f32 %v103, 0.0
  %v227 = vmax.f32 %v123, 0.0
  %v228 = vmax.f32 %v143, 0.0
  %v229 = vmax.f32 %v163, 0.0
  %v230 = vmax.f32 %v183, 0.0
  %v231 = vmax.f32 %v203, 0.0
  %v232 = vmax.f32 %v223, 0.0
  %234 = vset.pattern.permute.xlu0 0
  %235 = vperm.xlu0 %234, %v21
  %v236 = vpop.permute.xlu0 %235
  %vm238 = vcmask 64512
  %v240 = vsel %vm238, %v16, 0
  %242 = vmatpush.msra.mxu0 0.0
  %243 = vmatpush.msra.mxu0 0.0
  %244 = vmatpush.msra.mxu0 0.0
  %245 = vmatpush.msra.mxu0 0.0
  %246 = vmatpush.msra.mxu0 0.0
  %247 = vmatpush.msra.mxu0 0.0
  %248 = vmatpush.msra.mxu0 0.0
  %249 = vmatpush.msra.mxu0 0.0
  %250 = vmatpush.msra.mxu0 0.0
  %251 = vmatpush.msra.mxu0 0.0
  %252 = vmatpush.msra.mxu0 0.0
  %253 = vmatpush.msra.mxu0 0.0
  %254 = vmatpush.msra.mxu0 0.0
  %255 = vmatpush.msra.mxu0 0.0
  %256 = vmatpush.msra.mxu0 0.0
  %257 = vmatpush.msra.mxu0 %v225
  %258 = vmatmul.f32.gmra.mxu0 %v240
  %v259 = vpop.f32.mrf.mxu0
  %v260 = vadd.f32 %v236, %v259
  %261 = vdwg.mxu0
  %262 = vmatpush.msra.mxu0 0.0
  %263 = vmatpush.msra.mxu0 0.0
  %264 = vmatpush.msra.mxu0 0.0
  %265 = vmatpush.msra.mxu0 0.0
  %266 = vmatpush.msra.mxu0 0.0
  %267 = vmatpush.msra.mxu0 0.0
  %268 = vmatpush.msra.mxu0 0.0
  %269 = vmatpush.msra.mxu0 0.0
  %270 = vmatpush.msra.mxu0 0.0
  %271 = vmatpush.msra.mxu0 0.0
  %272 = vmatpush.msra.mxu0 0.0
  %273 = vmatpush.msra.mxu0 0.0
  %274 = vmatpush.msra.mxu0 0.0
  %275 = vmatpush.msra.mxu0 0.0
  %276 = vmatpush.msra.mxu0 0.0
  %277 = vmatpush.msra.mxu0 %v226
  %278 = vmatmul.f32.gmra.mxu0 %v240
  %v279 = vpop.f32.mrf.mxu0
  %v280 = vadd.f32 %v236, %v279
  %281 = vdwg.mxu0
  %282 = vmatpush.msra.mxu0 0.0
  %283 = vmatpush.msra.mxu0 0.0
  %284 = vmatpush.msra.mxu0 0.0
  %285 = vmatpush.msra.mxu0 0.0
  %286 = vmatpush.msra.mxu0 0.0
  %287 = vmatpush.msra.mxu0 0.0
  %288 = vmatpush.msra.mxu0 0.0
  %289 = vmatpush.msra.mxu0 0.0
  %290 = vmatpush.msra.mxu0 0.0
  %291 = vmatpush.msra.mxu0 0.0
  %292 = vmatpush.msra.mxu0 0.0
  %293 = vmatpush.msra.mxu0 0.0
  %294 = vmatpush.msra.mxu0 0.0
  %295 = vmatpush.msra.mxu0 0.0
  %296 = vmatpush.msra.mxu0 0.0
  %297 = vmatpush.msra.mxu0 %v227
  %298 = vmatmul.f32.gmra.mxu0 %v240
  %v299 = vpop.f32.mrf.mxu0
  %v300 = vadd.f32 %v236, %v299
  %301 = vdwg.mxu0
  %302 = vmatpush.msra.mxu0 0.0
  %303 = vmatpush.msra.mxu0 0.0
  %304 = vmatpush.msra.mxu0 0.0
  %305 = vmatpush.msra.mxu0 0.0
  %306 = vmatpush.msra.mxu0 0.0
  %307 = vmatpush.msra.mxu0 0.0
  %308 = vmatpush.msra.mxu0 0.0
  %309 = vmatpush.msra.mxu0 0.0
  %310 = vmatpush.msra.mxu0 0.0
  %311 = vmatpush.msra.mxu0 0.0
  %312 = vmatpush.msra.mxu0 0.0
  %313 = vmatpush.msra.mxu0 0.0
  %314 = vmatpush.msra.mxu0 0.0
  %315 = vmatpush.msra.mxu0 0.0
  %316 = vmatpush.msra.mxu0 0.0
  %317 = vmatpush.msra.mxu0 %v228
  %318 = vmatmul.f32.gmra.mxu0 %v240
  %v319 = vpop.f32.mrf.mxu0
  %v320 = vadd.f32 %v236, %v319
  %321 = vdwg.mxu0
  %322 = vmatpush.msra.mxu0 0.0
  %323 = vmatpush.msra.mxu0 0.0
  %324 = vmatpush.msra.mxu0 0.0
  %325 = vmatpush.msra.mxu0 0.0
  %326 = vmatpush.msra.mxu0 0.0
  %327 = vmatpush.msra.mxu0 0.0
  %328 = vmatpush.msra.mxu0 0.0
  %329 = vmatpush.msra.mxu0 0.0
  %330 = vmatpush.msra.mxu0 0.0
  %331 = vmatpush.msra.mxu0 0.0
  %332 = vmatpush.msra.mxu0 0.0
  %333 = vmatpush.msra.mxu0 0.0
  %334 = vmatpush.msra.mxu0 0.0
  %335 = vmatpush.msra.mxu0 0.0
  %336 = vmatpush.msra.mxu0 0.0
  %337 = vmatpush.msra.mxu0 %v229
  %338 = vmatmul.f32.gmra.mxu0 %v240
  %v339 = vpop.f32.mrf.mxu0
  %v340 = vadd.f32 %v236, %v339
  %341 = vdwg.mxu0
  %342 = vmatpush.msra.mxu0 0.0
  %343 = vmatpush.msra.mxu0 0.0
  %344 = vmatpush.msra.mxu0 0.0
  %345 = vmatpush.msra.mxu0 0.0
  %346 = vmatpush.msra.mxu0 0.0
  %347 = vmatpush.msra.mxu0 0.0
  %348 = vmatpush.msra.mxu0 0.0
  %349 = vmatpush.msra.mxu0 0.0
  %350 = vmatpush.msra.mxu0 0.0
  %351 = vmatpush.msra.mxu0 0.0
  %352 = vmatpush.msra.mxu0 0.0
  %353 = vmatpush.msra.mxu0 0.0
  %354 = vmatpush.msra.mxu0 0.0
  %355 = vmatpush.msra.mxu0 0.0
  %356 = vmatpush.msra.mxu0 0.0
  %357 = vmatpush.msra.mxu0 %v230
  %358 = vmatmul.f32.gmra.mxu0 %v240
  %v359 = vpop.f32.mrf.mxu0
  %v360 = vadd.f32 %v236, %v359
  %361 = vdwg.mxu0
  %362 = vmatpush.msra.mxu0 0.0
  %363 = vmatpush.msra.mxu0 0.0
  %364 = vmatpush.msra.mxu0 0.0
  %365 = vmatpush.msra.mxu0 0.0
  %366 = vmatpush.msra.mxu0 0.0
  %367 = vmatpush.msra.mxu0 0.0
  %368 = vmatpush.msra.mxu0 0.0
  %369 = vmatpush.msra.mxu0 0.0
  %370 = vmatpush.msra.mxu0 0.0
  %371 = vmatpush.msra.mxu0 0.0
  %372 = vmatpush.msra.mxu0 0.0
  %373 = vmatpush.msra.mxu0 0.0
  %374 = vmatpush.msra.mxu0 0.0
  %375 = vmatpush.msra.mxu0 0.0
  %376 = vmatpush.msra.mxu0 0.0
  %377 = vmatpush.msra.mxu0 %v231
  %378 = vmatmul.f32.gmra.mxu0 %v240
  %v379 = vpop.f32.mrf.mxu0
  %v380 = vadd.f32 %v236, %v379
  %381 = vdwg.mxu0
  %382 = vmatpush.msra.mxu0 0.0
  %383 = vmatpush.msra.mxu0 0.0
  %384 = vmatpush.msra.mxu0 0.0
  %385 = vmatpush.msra.mxu0 0.0
  %386 = vmatpush.msra.mxu0 0.0
  %387 = vmatpush.msra.mxu0 0.0
  %388 = vmatpush.msra.mxu0 0.0
  %389 = vmatpush.msra.mxu0 0.0
  %390 = vmatpush.msra.mxu0 0.0
  %391 = vmatpush.msra.mxu0 0.0
  %392 = vmatpush.msra.mxu0 0.0
  %393 = vmatpush.msra.mxu0 0.0
  %394 = vmatpush.msra.mxu0 0.0
  %395 = vmatpush.msra.mxu0 0.0
  %396 = vmatpush.msra.mxu0 0.0
  %397 = vmatpush.msra.mxu0 %v232
  %398 = vmatmul.f32.gmra.mxu0 %v240
  %v399 = vpop.f32.mrf.mxu0
  %v400 = vadd.f32 %v236, %v399
  %401 = vdwg.mxu0
  %v402 = vmax.f32 %v260, 0.0
  %v403 = vmax.f32 %v280, 0.0
  %v404 = vmax.f32 %v300, 0.0
  %v405 = vmax.f32 %v320, 0.0
  %v406 = vmax.f32 %v340, 0.0
  %v407 = vmax.f32 %v360, 0.0
  %v408 = vmax.f32 %v380, 0.0
  %v409 = vmax.f32 %v400, 0.0
  %411 = vset.pattern.permute.xlu0 0
  %412 = vperm.xlu0 %411, %v23
  %v413 = vpop.permute.xlu0 %412
  %v416 = vsel %vm238, %v18, 0
  %418 = vmatpush.msra.mxu0 0.0
  %419 = vmatpush.msra.mxu0 0.0
  %420 = vmatpush.msra.mxu0 0.0
  %421 = vmatpush.msra.mxu0 0.0
  %422 = vmatpush.msra.mxu0 0.0
  %423 = vmatpush.msra.mxu0 0.0
  %424 = vmatpush.msra.mxu0 0.0
  %425 = vmatpush.msra.mxu0 0.0
  %426 = vmatpush.msra.mxu0 0.0
  %427 = vmatpush.msra.mxu0 0.0
  %428 = vmatpush.msra.mxu0 0.0
  %429 = vmatpush.msra.mxu0 0.0
  %430 = vmatpush.msra.mxu0 0.0
  %431 = vmatpush.msra.mxu0 0.0
  %432 = vmatpush.msra.mxu0 0.0
  %433 = vmatpush.msra.mxu0 %v402
  %434 = vmatmul.f32.gmra.mxu0 %v416
  %v435 = vpop.f32.mrf.mxu0
  %v436 = vadd.f32 %v413, %v435
  %437 = vdwg.mxu0
  %438 = vmatpush.msra.mxu0 0.0
  %439 = vmatpush.msra.mxu0 0.0
  %440 = vmatpush.msra.mxu0 0.0
  %441 = vmatpush.msra.mxu0 0.0
  %442 = vmatpush.msra.mxu0 0.0
  %443 = vmatpush.msra.mxu0 0.0
  %444 = vmatpush.msra.mxu0 0.0
  %445 = vmatpush.msra.mxu0 0.0
  %446 = vmatpush.msra.mxu0 0.0
  %447 = vmatpush.msra.mxu0 0.0
  %448 = vmatpush.msra.mxu0 0.0
  %449 = vmatpush.msra.mxu0 0.0
  %450 = vmatpush.msra.mxu0 0.0
  %451 = vmatpush.msra.mxu0 0.0
  %452 = vmatpush.msra.mxu0 0.0
  %453 = vmatpush.msra.mxu0 %v403
  %454 = vmatmul.f32.gmra.mxu0 %v416
  %v455 = vpop.f32.mrf.mxu0
  %v456 = vadd.f32 %v413, %v455
  %457 = vdwg.mxu0
  %458 = vmatpush.msra.mxu0 0.0
  %459 = vmatpush.msra.mxu0 0.0
  %460 = vmatpush.msra.mxu0 0.0
  %461 = vmatpush.msra.mxu0 0.0
  %462 = vmatpush.msra.mxu0 0.0
  %463 = vmatpush.msra.mxu0 0.0
  %464 = vmatpush.msra.mxu0 0.0
  %465 = vmatpush.msra.mxu0 0.0
  %466 = vmatpush.msra.mxu0 0.0
  %467 = vmatpush.msra.mxu0 0.0
  %468 = vmatpush.msra.mxu0 0.0
  %469 = vmatpush.msra.mxu0 0.0
  %470 = vmatpush.msra.mxu0 0.0
  %471 = vmatpush.msra.mxu0 0.0
  %472 = vmatpush.msra.mxu0 0.0
  %473 = vmatpush.msra.mxu0 %v404
  %474 = vmatmul.f32.gmra.mxu0 %v416
  %v475 = vpop.f32.mrf.mxu0
  %v476 = vadd.f32 %v413, %v475
  %477 = vdwg.mxu0
  %478 = vmatpush.msra.mxu0 0.0
  %479 = vmatpush.msra.mxu0 0.0
  %480 = vmatpush.msra.mxu0 0.0
  %481 = vmatpush.msra.mxu0 0.0
  %482 = vmatpush.msra.mxu0 0.0
  %483 = vmatpush.msra.mxu0 0.0
  %484 = vmatpush.msra.mxu0 0.0
  %485 = vmatpush.msra.mxu0 0.0
  %486 = vmatpush.msra.mxu0 0.0
  %487 = vmatpush.msra.mxu0 0.0
  %488 = vmatpush.msra.mxu0 0.0
  %489 = vmatpush.msra.mxu0 0.0
  %490 = vmatpush.msra.mxu0 0.0
  %491 = vmatpush.msra.mxu0 0.0
  %492 = vmatpush.msra.mxu0 0.0
  %493 = vmatpush.msra.mxu0 %v405
  %494 = vmatmul.f32.gmra.mxu0 %v416
  %v495 = vpop.f32.mrf.mxu0
  %v496 = vadd.f32 %v413, %v495
  %497 = vdwg.mxu0
  %498 = vmatpush.msra.mxu0 0.0
  %499 = vmatpush.msra.mxu0 0.0
  %500 = vmatpush.msra.mxu0 0.0
  %501 = vmatpush.msra.mxu0 0.0
  %502 = vmatpush.msra.mxu0 0.0
  %503 = vmatpush.msra.mxu0 0.0
  %504 = vmatpush.msra.mxu0 0.0
  %505 = vmatpush.msra.mxu0 0.0
  %506 = vmatpush.msra.mxu0 0.0
  %507 = vmatpush.msra.mxu0 0.0
  %508 = vmatpush.msra.mxu0 0.0
  %509 = vmatpush.msra.mxu0 0.0
  %510 = vmatpush.msra.mxu0 0.0
  %511 = vmatpush.msra.mxu0 0.0
  %512 = vmatpush.msra.mxu0 0.0
  %513 = vmatpush.msra.mxu0 %v406
  %514 = vmatmul.f32.gmra.mxu0 %v416
  %v515 = vpop.f32.mrf.mxu0
  %v516 = vadd.f32 %v413, %v515
  %517 = vdwg.mxu0
  %518 = vmatpush.msra.mxu0 0.0
  %519 = vmatpush.msra.mxu0 0.0
  %520 = vmatpush.msra.mxu0 0.0
  %521 = vmatpush.msra.mxu0 0.0
  %522 = vmatpush.msra.mxu0 0.0
  %523 = vmatpush.msra.mxu0 0.0
  %524 = vmatpush.msra.mxu0 0.0
  %525 = vmatpush.msra.mxu0 0.0
  %526 = vmatpush.msra.mxu0 0.0
  %527 = vmatpush.msra.mxu0 0.0
  %528 = vmatpush.msra.mxu0 0.0
  %529 = vmatpush.msra.mxu0 0.0
  %530 = vmatpush.msra.mxu0 0.0
  %531 = vmatpush.msra.mxu0 0.0
  %532 = vmatpush.msra.mxu0 0.0
  %533 = vmatpush.msra.mxu0 %v407
  %534 = vmatmul.f32.gmra.mxu0 %v416
  %v535 = vpop.f32.mrf.mxu0
  %v536 = vadd.f32 %v413, %v535
  %537 = vdwg.mxu0
  %538 = vmatpush.msra.mxu0 0.0
  %539 = vmatpush.msra.mxu0 0.0
  %540 = vmatpush.msra.mxu0 0.0
  %541 = vmatpush.msra.mxu0 0.0
  %542 = vmatpush.msra.mxu0 0.0
  %543 = vmatpush.msra.mxu0 0.0
  %544 = vmatpush.msra.mxu0 0.0
  %545 = vmatpush.msra.mxu0 0.0
  %546 = vmatpush.msra.mxu0 0.0
  %547 = vmatpush.msra.mxu0 0.0
  %548 = vmatpush.msra.mxu0 0.0
  %549 = vmatpush.msra.mxu0 0.0
  %550 = vmatpush.msra.mxu0 0.0
  %551 = vmatpush.msra.mxu0 0.0
  %552 = vmatpush.msra.mxu0 0.0
  %553 = vmatpush.msra.mxu0 %v408
  %554 = vmatmul.f32.gmra.mxu0 %v416
  %v555 = vpop.f32.mrf.mxu0
  %v556 = vadd.f32 %v413, %v555
  %557 = vdwg.mxu0
  %558 = vmatpush.msra.mxu0 0.0
  %559 = vmatpush.msra.mxu0 0.0
  %560 = vmatpush.msra.mxu0 0.0
  %561 = vmatpush.msra.mxu0 0.0
  %562 = vmatpush.msra.mxu0 0.0
  %563 = vmatpush.msra.mxu0 0.0
  %564 = vmatpush.msra.mxu0 0.0
  %565 = vmatpush.msra.mxu0 0.0
  %566 = vmatpush.msra.mxu0 0.0
  %567 = vmatpush.msra.mxu0 0.0
  %568 = vmatpush.msra.mxu0 0.0
  %569 = vmatpush.msra.mxu0 0.0
  %570 = vmatpush.msra.mxu0 0.0
  %571 = vmatpush.msra.mxu0 0.0
  %572 = vmatpush.msra.mxu0 0.0
  %573 = vmatpush.msra.mxu0 %v409
  %574 = vmatmul.f32.gmra.mxu0 %v416
  %v575 = vpop.f32.mrf.mxu0
  %v576 = vadd.f32 %v413, %v575
  %577 = vdwg.mxu0
  %v586 = vrot.slane %v456, 7
  %v587 = vrot.slane %v476, 6
  %v588 = vrot.slane %v496, 5
  %v589 = vrot.slane %v516, 4
  %v590 = vrot.slane %v536, 3
  %v591 = vrot.slane %v556, 2
  %v592 = vrot.slane %v576, 1
  %vm593 = vcmask 1040384
  %v594 = vsel %vm593, %v436, %v586
  %vm595 = vcmask 1042434
  %v596 = vsel %vm595, %v587, %v588
  %v597 = vsel %vm48, %v594, %v596
  %vm598 = vcmask 1044484
  %v599 = vsel %vm598, %v589, %v590
  %vm600 = vcmask 1046534
  %v601 = vsel %vm600, %v591, %v592
  %vm602 = vcmask 1045508
  %v603 = vsel %vm602, %v599, %v601
  %vm604 = vcmask 1043456
  %v605 = vsel %vm604, %v597, %v603
  %607 = vst [vmem:[%s3] sm:$0xff] %v605
  // Predicated region
  $region14: #{net_forward.1} parent=0 // pred_check
    _
  $region15: #{net_forward.1} parent=0 // pred_check_branch
    %609 = sbr.rel (0) target = $region17
  $region16: #{net_forward.1} parent=0 // pred_region
    _
  $region17: #{net_forward.1} parent=0 // pred_fallthru
    _
  // Predicated region
  $region18: #{net_forward.1} parent=0 // pred_check
    _
  $region19: #{net_forward.1} parent=0 // pred_check_branch
    %611 = sbr.rel (0) target = $region21
  $region20: #{net_forward.1} parent=0 // pred_region
    _
  $region21: #{net_forward.1} parent=0 // pred_fallthru
    _

</llo_original>
